<compile_context>
chip_gen: v6e
topology: v6e:2x2x1
jax: 0.10.0
libtpu: 0.0.40
codegen_flags: <defaults>
</compile_context>

<pallas_src>
import numpy as np
import jax
import jax.numpy as jnp
from jax.experimental import pallas as pl
from jax.experimental.pallas import tpu as pltpu


# --------------------------------------------------------------------------- #
# Kernel: two MXU dots per station row-block.
#   out = W_spatial_rows @ emd_all  +  coef_rows @ basis
# W_spatial_rows / emd_all are bf16 (f32 accumulate); coef/basis stay f32 so
# trend*t and the residual sinusoids keep full precision.
# --------------------------------------------------------------------------- #
def _emd_hybrid_kernel(wsp_ref, emd_ref, coef_ref, basis_ref, out_ref):
    mix = jnp.dot(wsp_ref[...], emd_ref[...], preferred_element_type=jnp.float32)
    det = jnp.dot(coef_ref[...], basis_ref[...], preferred_element_type=jnp.float32)
    out_ref[...] = (mix + det).astype(out_ref.dtype)


def _round_up(x, m):
    return (x + m - 1) // m * m


def emd_hybrid_forward(time_vector, constant_offset, linear_trend, emd_seasonal,
                       nbr_idx, weights, local_w_n,
                       emd_spatial_w, local_spatial_w,
                       residual_amplitudes, residual_phases, residual_periods,
                       block_m=128, matmul_dtype=jnp.bfloat16,
                       out_dtype=jnp.float32):
    f32 = jnp.float32
    n_stations = constant_offset.shape[0]
    n_time = time_vector.shape[0]
    assert block_m % 8 == 0 and 256 % block_m == 0, "block_m must divide 256"

    # MXU-native 256 alignment on both station (M / contraction) and time (lane)
    # axes (v6e/v7x 2x256^2 tile; 128 would also be legal and is native on v5e).
    n_pad = _round_up(n_stations, 256)
    t_pad = _round_up(n_time, 256)
    n_coef = 16                                   # 5 sin + 5 cos + trend + offset + 4 pad

    time_p = jnp.pad(time_vector.astype(f32), (0, t_pad - n_time))

    # ---------------- hoisted time-independent preprocessing (plain XLA) -------------
    # 1) Spatial mixing matrix (replaces in-kernel local/regional dots + blend).
    ew = jax.nn.sigmoid(emd_spatial_w.astype(f32))            # (N,)
    lw = jax.nn.sigmoid(local_spatial_w.astype(f32))
    w_comb = ew[:, None] * (lw[:, None] * local_w_n.astype(f32)
                            + (1.0 - lw[:, None]) * weights.astype(f32))   # (N, K)
    rows = jnp.arange(n_stations)
    w_sp = jnp.zeros((n_stations, n_stations), f32)
    w_sp = w_sp.at[rows[:, None], nbr_idx].add(w_comb)
    w_sp = w_sp.at[rows, rows].add(1.0 - ew)                   # fold (1-ew)*diag in
    w_sp_p = jnp.pad(w_sp, ((0, n_pad - n_stations), (0, n_pad - n_stations)))

    # 2) Summed EMD seasonal signal (resident matmul RHS).
    emd_sum = jnp.sum(emd_seasonal.astype(f32), axis=1)        # (N, T)
    emd_p = jnp.pad(emd_sum, ((0, n_pad - n_stations), (0, t_pad - n_time)))

    # 3) Neighbor-statistics path -> per-station residual coefficients (N, 10).
    amps = residual_amplitudes.astype(f32)
    phs = residual_phases.astype(f32)
    w_nb = weights.astype(f32)[:, :, None]                      # (N, K, 1)

    nv_a = amps[nbr_idx]                                        # (N, K, 5)
    var_a = jnp.var(nv_a, axis=1, ddof=1)                       # torch.var default (unbiased)
    af_a = 0.2 * jax.nn.sigmoid(1.0 - var_a)                    # smoothing_factor * sigmoid(-var+1)
    sm_amps = (1.0 - af_a) * amps + af_a * jnp.sum(nv_a * w_nb, axis=1)

    nv_p = phs[nbr_idx]
    var_p = jnp.var(nv_p, axis=1, ddof=1)
    af_p = 0.2 * jax.nn.sigmoid(1.0 - var_p)
    mix_re = (1.0 - af_p) * jnp.cos(phs) + af_p * jnp.sum(jnp.cos(nv_p) * w_nb, axis=1)
    mix_im = (1.0 - af_p) * jnp.sin(phs) + af_p * jnp.sum(jnp.sin(nv_p) * w_nb, axis=1)
    # cos/sin of torch.angle(mix) without arctan2: z / |z|
    inv_norm = jax.lax.rsqrt(mix_re * mix_re + mix_im * mix_im + 1e-30)
    coeff_sin = sm_amps * mix_re * inv_norm                     # multiplies sin(2*pi*f*t)
    coeff_cos = sm_amps * mix_im * inv_norm                     # multiplies cos(2*pi*f*t)

    # 4) Packed per-station coefficient block (also absorbs offset + trend*t).
    coef = jnp.concatenate(
        [coeff_sin, coeff_cos,
         linear_trend.astype(f32)[:, None], constant_offset.astype(f32)[:, None],
         jnp.zeros((n_stations, n_coef - 12), f32)], axis=1)    # (N, 16)
    coef_p = jnp.pad(coef, ((0, n_pad - n_stations), (0, 0)))

    # 5) Deterministic basis: residual sinusoids via angle addition + [t; 1].
    periods = jnp.clip(residual_periods.astype(f32), 15.0, 350.0)
    ang = (2.0 * np.pi) * (1.0 / periods)[:, None] * time_p[None, :]   # (5, Tp)
    basis = jnp.concatenate(
        [jnp.sin(ang), jnp.cos(ang),
         time_p[None, :], jnp.ones((1, t_pad), f32),
         jnp.zeros((n_coef - 12, t_pad), f32)], axis=0)         # (16, Tp)

    # ---------------- Pallas call -----------------------------------------------------
    ms = jnp.dtype(matmul_dtype).itemsize
    osz = jnp.dtype(out_dtype).itemsize
    block_bytes = (block_m * n_pad * ms          # W_spatial row block
                   + n_pad * t_pad * ms          # resident EMD RHS
                   + block_m * 128 * 4           # coef block (lane-padded)
                   + n_coef * t_pad * 4          # basis
                   + block_m * t_pad * osz)      # output block
    vmem_limit = int(min(max(3 * block_bytes + (1 << 20), 32 << 20), 56 << 20))

    row_block = lambda i: (i, 0)
    full_block = lambda i: (0, 0)

    out = pl.pallas_call(
        _emd_hybrid_kernel,
        out_shape=jax.ShapeDtypeStruct((n_pad, t_pad), out_dtype),
        grid=(n_pad // block_m,),
        in_specs=[
            pl.BlockSpec((block_m, n_pad), row_block),    # W_spatial rows (matmul dtype)
            pl.BlockSpec((n_pad, t_pad), full_block),     # EMD sum, resident RHS (matmul dtype)
            pl.BlockSpec((block_m, n_coef), row_block),   # packed per-station coefficients (f32)
            pl.BlockSpec((n_coef, t_pad), full_block),    # sinusoid / trend basis (f32)
        ],
        out_specs=pl.BlockSpec((block_m, t_pad), row_block),
        compiler_params=pltpu.CompilerParams(
            dimension_semantics=("parallel",),
            vmem_limit_bytes=vmem_limit),
    )(
        w_sp_p.astype(matmul_dtype),
        emd_p.astype(matmul_dtype),
        coef_p,
        basis,
    )
    return out[:n_stations, :n_time].astype(f32)


# --------------------------------------------------------------------------- #
# Pure-JAX mirror of the PyTorch forward (gather-based, per-station math).
# --------------------------------------------------------------------------- #
def reference_forward(time_vector, constant_offset, linear_trend, emd_seasonal,
                      nbr_idx, weights, local_w_n,
                      emd_spatial_w, local_spatial_w,
                      residual_amplitudes, residual_phases, residual_periods):
    emd_sig = jnp.sum(emd_seasonal, axis=1)                      # (N, T)
    nbr_sig = emd_sig[nbr_idx]                                   # (N, K, T)
    local_avg = jnp.sum(nbr_sig * local_w_n[:, :, None], axis=1)
    reg_avg = jnp.sum(nbr_sig * weights[:, :, None], axis=1)
    ew = jax.nn.sigmoid(emd_spatial_w)[:, None]
    lw = jax.nn.sigmoid(local_spatial_w)[:, None]
    spatial = (1 - ew) * emd_sig + ew * lw * local_avg + ew * (1 - lw) * reg_avg

    def smooth(param, is_phase):
        nv = param[nbr_idx]                                      # (N, K, 5)
        var = jnp.var(nv, axis=1, ddof=1)
        af = 0.2 * jax.nn.sigmoid(1.0 - var)
        if is_phase:
            wc = jnp.sum(jnp.cos(nv) * weights[:, :, None], axis=1)
            ws = jnp.sum(jnp.sin(nv) * weights[:, :, None], axis=1)
            re = (1 - af) * jnp.cos(param) + af * wc
            im = (1 - af) * jnp.sin(param) + af * ws
            return jnp.arctan2(im, re)
        wavg = jnp.sum(nv * weights[:, :, None], axis=1)
        return (1 - af) * param + af * wavg

    sm_a = smooth(residual_amplitudes, False)
    sm_p = smooth(residual_phases, True)
    resid = jnp.zeros_like(spatial)
    for c in range(5):
        period = jnp.clip(residual_periods[c], 15.0, 350.0)
        freq = 1.0 / period
        resid = resid + sm_a[:, c:c + 1] * jnp.sin(
            2 * np.pi * freq * time_vector[None, :] + sm_p[:, c:c + 1])
    return (constant_offset[:, None] + linear_trend[:, None] * time_vector[None, :]
            + spatial + resid)


if __name__ == "__main__":
    # stations, timepoints, neighbors, EMD bands (N, T deliberately unaligned
    # to exercise the padding; n_pad = 256, block_m = 64 -> 4 parallel steps).
    N, T, K, BANDS = 250, 150, 15, 4
    key = jax.random.PRNGKey(0)
    k1, k2, k3, k4 = jax.random.split(key, 4)

    # --- __init__-time glue: coordinates + kNN neighbor graph (numpy) ---
    # TODO(synk): EMD IMF band extraction (scipy.signal peak/zero-crossing analysis)
    # is host-side preprocessing; synthesized here as deterministic random bands.
    coords = np.asarray(jax.random.uniform(k1, (N, 2), minval=0.0, maxval=100.0))
    d2 = np.sum((coords[:, None, :] - coords[None, :, :]) ** 2, axis=-1)
    np.fill_diagonal(d2, np.inf)
    nbr_idx = np.argsort(d2, axis=1)[:, :K]
    nbr_dist = np.sqrt(np.take_along_axis(d2, nbr_idx, axis=1))

    local_w = np.exp(-nbr_dist / (np.mean(nbr_dist, axis=1, keepdims=True) * 0.3))
    regional_w = 1.0 / (nbr_dist + np.mean(nbr_dist) * 0.1)
    combined = 0.6 * local_w + 0.4 * regional_w
    weights = (combined / (np.sum(combined, axis=1, keepdims=True) + 1e-6)).astype(np.float32)
    local_w_n = (local_w / (np.sum(local_w, axis=1, keepdims=True) + 1e-6)).astype(np.float32)

    # --- deterministic synthetic buffers / parameters (shapes from __init__) ---
    time_vector = jnp.arange(T, dtype=jnp.float32)
    linear_trend = jax.random.normal(k2, (N,), jnp.float32) * 0.05     # ps00_rates buffer
    emd_seasonal = jax.random.normal(k3, (N, BANDS, T), jnp.float32)   # emd_seasonal_components
    constant_offset = jnp.zeros((N,), jnp.float32)
    residual_amplitudes = jnp.ones((N, 5), jnp.float32) * 3.0
    residual_phases = jax.random.uniform(k4, (N, 5), jnp.float32) * (2.0 * np.pi)
    residual_periods = jnp.array([25.0, 45.0, 75.0, 150.0, 300.0], jnp.float32)
    emd_spatial_w = jnp.ones((N,), jnp.float32) * 0.1
    local_spatial_w = jnp.ones((N,), jnp.float32) * 0.2

    out = emd_hybrid_forward(
        time_vector, constant_offset, linear_trend, emd_seasonal,
        jnp.asarray(nbr_idx), jnp.asarray(weights), jnp.asarray(local_w_n),
        emd_spatial_w, local_spatial_w,
        residual_amplitudes, residual_phases, residual_periods,
        block_m=64, matmul_dtype=jnp.bfloat16, out_dtype=jnp.float32)
    out = jax.block_until_ready(out)

    ref = reference_forward(
        time_vector, constant_offset, linear_trend, emd_seasonal,
        jnp.asarray(nbr_idx), jnp.asarray(weights), jnp.asarray(local_w_n),
        emd_spatial_w, local_spatial_w,
        residual_amplitudes, residual_phases, residual_periods)

    # tolerance accounts for the bf16 mixing-matrix / EMD operands (including the
    # (1-ew) diagonal term now folded into the bf16 W_spatial); accumulation is f32.
    np.testing.assert_allclose(np.asarray(out), np.asarray(ref), rtol=3e-2, atol=8e-2)
    print("KERNEL_OK")
</pallas_src>

<mosaic_0001>
module attributes {stable_mosaic.version = 11 : i64} {
  func.func @_emd_hybrid_kernel(%arg0: i32, %arg1: memref<64x256xbf16, #tpu.memory_space<vmem>>, %arg2: memref<256x256xbf16, #tpu.memory_space<vmem>>, %arg3: memref<64x16xf32, #tpu.memory_space<vmem>>, %arg4: memref<16x256xf32, #tpu.memory_space<vmem>>, %arg5: memref<64x256xf32, #tpu.memory_space<vmem>>) attributes {dimension_semantics = [#tpu.dimension_semantics<parallel>], iteration_bounds = array<i64: 4>, scalar_prefetch = 0 : i64, scratch_operands = 0 : i64, tpu.core_type = #tpu.core_type<tc>, window_params = [{transform_indices = @transform_0, window_bounds = array<i64: 64, 256>}, {pipeline_mode = #tpu.pipeline_mode<synchronous>, transform_indices = @transform_1, window_bounds = array<i64: 256, 256>}, {transform_indices = @transform_2, window_bounds = array<i64: 64, 16>}, {pipeline_mode = #tpu.pipeline_mode<synchronous>, transform_indices = @transform_3, window_bounds = array<i64: 16, 256>}, {transform_indices = @transform_4, window_bounds = array<i64: 64, 256>}]} {
    %c0 = arith.constant 0 : index
    %c0_0 = arith.constant 0 : index
    %0 = vector.load %arg1[%c0, %c0_0] : memref<64x256xbf16, #tpu.memory_space<vmem>>, vector<64x256xbf16>
    %c0_1 = arith.constant 0 : index
    %c0_2 = arith.constant 0 : index
    %1 = vector.load %arg2[%c0_1, %c0_2] : memref<256x256xbf16, #tpu.memory_space<vmem>>, vector<256x256xbf16>
    %cst = arith.constant dense<0.000000e+00> : vector<64x256xf32>
    %2 = tpu.matmul %0, %1, %cst {dimension_numbers = #tpu.dot_dimension_numbers<[1], [0], [0], [1], [0, 0, 1, 1], [], []>} : vector<64x256xbf16>, vector<256x256xbf16>, vector<64x256xf32> -> vector<64x256xf32>
    %c0_3 = arith.constant 0 : index
    %c0_4 = arith.constant 0 : index
    %3 = vector.load %arg3[%c0_3, %c0_4] : memref<64x16xf32, #tpu.memory_space<vmem>>, vector<64x16xf32>
    %c0_5 = arith.constant 0 : index
    %c0_6 = arith.constant 0 : index
    %4 = vector.load %arg4[%c0_5, %c0_6] : memref<16x256xf32, #tpu.memory_space<vmem>>, vector<16x256xf32>
    %cst_7 = arith.constant dense<0.000000e+00> : vector<64x256xf32>
    %5 = tpu.matmul %3, %4, %cst_7 {dimension_numbers = #tpu.dot_dimension_numbers<[1], [0], [0], [1], [0, 0, 1, 1], [], []>} : vector<64x16xf32>, vector<16x256xf32>, vector<64x256xf32> -> vector<64x256xf32>
    %6 = arith.addf %2, %5 : vector<64x256xf32>
    %c0_8 = arith.constant 0 : index
    %c0_9 = arith.constant 0 : index
    %7 = vector.load %arg5[%c0_8, %c0_9] : memref<64x256xf32, #tpu.memory_space<vmem>>, vector<64x256xf32>
    tpu.vector_store %arg5[%c0_8, %c0_9], %6 {strides = array<i32>} : memref<64x256xf32, #tpu.memory_space<vmem>>, vector<64x256xf32>,
    return
  }
  func.func @transform_0(%arg0: i32) -> (i32, i32) {
    %c0_i32 = arith.constant 0 : i32
    %c0_i32_0 = arith.constant 0 : i32
    return %arg0, %c0_i32 : i32, i32
  }
  func.func @transform_1(%arg0: i32) -> (i32, i32) {
    %c0_i32 = arith.constant 0 : i32
    %c0_i32_0 = arith.constant 0 : i32
    %c0_i32_1 = arith.constant 0 : i32
    return %c0_i32, %c0_i32_0 : i32, i32
  }
  func.func @transform_2(%arg0: i32) -> (i32, i32) {
    %c0_i32 = arith.constant 0 : i32
    %c0_i32_0 = arith.constant 0 : i32
    return %arg0, %c0_i32 : i32, i32
  }
  func.func @transform_3(%arg0: i32) -> (i32, i32) {
    %c0_i32 = arith.constant 0 : i32
    %c0_i32_0 = arith.constant 0 : i32
    %c0_i32_1 = arith.constant 0 : i32
    return %c0_i32, %c0_i32_0 : i32, i32
  }
  func.func @transform_4(%arg0: i32) -> (i32, i32) {
    %c0_i32 = arith.constant 0 : i32
    %c0_i32_0 = arith.constant 0 : i32
    return %arg0, %c0_i32 : i32, i32
  }
}

</mosaic_0001>

<llo_original>
// kernel: tpu_custom_call.1
$region0: #{tpu_custom_call.1}
  #allocation0 [shape = 'u32[]', space=smem, size = 0x4, offset = 0x4, fixed_abs, tag = 'smem constant byte address 0x4 - core index']
  #allocation1 [shape = 'u32[144,128]{1,0:T(1,128)}', space=vmem, size = 0x12000, scoped, tag = 'internal scratch']
  %s0 = inlined_call_operand.vmem [shape: bf16[256,256], index: 0, kind: input, shape index: {}]
  %s1 = inlined_call_operand.hbm [shape: bf16[256,256], index: 1, kind: input, shape index: {}]
  %s2 = inlined_call_operand.vmem [shape: f32[256,16], index: 2, kind: input, shape index: {}]
  %s3 = inlined_call_operand.vmem [shape: f32[16,256], index: 3, kind: input, shape index: {}]
  %s4 = inlined_call_operand.hbm [shape: f32[256,256], index: 4, kind: output, shape index: {}]
  %s5 = sld [smem:[#allocation0]]
  $region53: #{tpu_custom_call.1} parent=0
    _
  %s7 = ssub.s32 1, %s5
  %s8 = scalar_select 0, %s7, %s5
  $region1: #{tpu_custom_call.1} parent=0
    #allocation2 [shape = 'u8[131072]{0}', space=vmem, size = 0x20000, scoped, tag = 'input window, operand 1, single buffered']
    #allocation3 [shape = 's32[2]{0}', space=sflag, size = 0x8, scoped, tag = 'scoped memory for tpu_custom_call.1']
    #allocation4 [shape = 's32[2]{0}', space=sflag, size = 0x8, scoped, tag = 'scoped memory for tpu_custom_call.1']
    #allocation5 [shape = 'u8[131072]{0}', space=vmem, size = 0x20000, scoped, tag = 'output window, operand 0']
    %9 = vsyncpa [#allocation3], 0
    %10 = vsyncpa [#allocation4], 0
    %s11 = scalar_lea.sflag [#allocation4], 1
    %12 = vsyncpa %s11, 0
    loop: start=0, step=1, limit=6
    $region2: #{tpu_custom_call.1} parent=1 // loop_pre_header
      _
    $region3: #{tpu_custom_call.1} parent=1 // loop_header
      %s14 = sphi 0, %s18
      %p15 = scmp.ge.s32.totalorder %s14, 6
      %s24 = sphi 0, %s26
      %s27 = sphi 0, %s24
      %s28 = sphi 0, %s27
      %s44 = sphi 0, %s28
      %s48 = sphi 0, %s48
      %s50 = sphi 0, %s48
      %s51 = sphi 0, %s50
      %s65 = sphi 0, %s51
      %s71 = sphi 0, %s73
      %s74 = sphi 0, %s71
      %s75 = sphi 0, %s74
      %s91 = sphi 0, %s75
      %s95 = sphi 0, %s95
      %s97 = sphi 0, %s95
      %s98 = sphi 0, %s97
      %s112 = sphi 0, %s98
      %s118 = sphi 0, %s120
      %s121 = sphi 0, %s118
      %s122 = sphi 0, %s121
      %s138 = sphi 0, %s122
    $region4: #{tpu_custom_call.1} parent=1 // loop_header_branch
      %17 = sbr.rel (%p15) target = $region8
    $region5: #{tpu_custom_call.1} parent=1 // loop_body
      %s19 = ssub.s32 %s14, 1
      %s20 = ssub.s32 %s14, 2
      %s21 = sadd.s32 %s14, 1
      %s22 = ssub.s32 %s14, %s21
      %p23 = scmp.eq.s32.totalorder %s22, 0
      %s25 = sadd.s32 %s24, 1
      %s26 = scalar_select %p23, %s24, %s25
      %p29 = pneg %p23
      %p30 = scmp.eq.s32.totalorder %s14, 3
      %p31 = por %p29, %p30
      %p32 = scmp.ne.s32.totalorder %s24, %s27
      %p33 = scmp.eq.s32.totalorder %s14, 0
      %p34 = por %p32, %p33
      %p35 = scmp.ne.s32.totalorder %s24, %s27
      %p36 = scmp.eq.s32.totalorder %s19, 3
      %p37 = por %p35, %p36
      %p38 = scmp.ne.s32.totalorder %s27, %s28
      %p39 = scmp.eq.s32.totalorder %s19, 0
      %p40 = por %p38, %p39
      %p41 = scmp.ne.s32.totalorder %s27, %s28
      %p42 = scmp.eq.s32.totalorder %s20, 3
      %p43 = por %p41, %p42
      %p45 = scmp.ne.s32.totalorder %s28, %s44
      %p46 = scmp.eq.s32.totalorder %s20, 0
      %p47 = por %p45, %p46
      %s49 = sadd.s32 %s48, 1
      %p52 = scmp.eq.s32.totalorder %s14, 3
      %p53 = scmp.ne.s32.totalorder %s48, %s50
      %p54 = scmp.eq.s32.totalorder %s14, 0
      %p55 = por %p53, %p54
      %p56 = scmp.ne.s32.totalorder %s48, %s50
      %p57 = scmp.eq.s32.totalorder %s19, 3
      %p58 = por %p56, %p57
      %p59 = scmp.ne.s32.totalorder %s50, %s51
      %p60 = scmp.eq.s32.totalorder %s19, 0
      %p61 = por %p59, %p60
      %p62 = scmp.ne.s32.totalorder %s50, %s51
      %p63 = scmp.eq.s32.totalorder %s20, 3
      %p64 = por %p62, %p63
      %p66 = scmp.ne.s32.totalorder %s51, %s65
      %p67 = scmp.eq.s32.totalorder %s20, 0
      %p68 = por %p66, %p67
      %s69 = ssub.s32 %s14, %s21
      %p70 = scmp.eq.s32.totalorder %s69, 0
      %s72 = sadd.s32 %s71, 1
      %s73 = scalar_select %p70, %s71, %s72
      %p76 = pneg %p70
      %p77 = scmp.eq.s32.totalorder %s14, 3
      %p78 = por %p76, %p77
      %p79 = scmp.ne.s32.totalorder %s71, %s74
      %p80 = scmp.eq.s32.totalorder %s14, 0
      %p81 = por %p79, %p80
      %p82 = scmp.ne.s32.totalorder %s71, %s74
      %p83 = scmp.eq.s32.totalorder %s19, 3
      %p84 = por %p82, %p83
      %p85 = scmp.ne.s32.totalorder %s74, %s75
      %p86 = scmp.eq.s32.totalorder %s19, 0
      %p87 = por %p85, %p86
      %p88 = scmp.ne.s32.totalorder %s74, %s75
      %p89 = scmp.eq.s32.totalorder %s20, 3
      %p90 = por %p88, %p89
      %p92 = scmp.ne.s32.totalorder %s75, %s91
      %p93 = scmp.eq.s32.totalorder %s20, 0
      %p94 = por %p92, %p93
      %s96 = sadd.s32 %s95, 1
      %p99 = scmp.eq.s32.totalorder %s14, 3
      %p100 = scmp.ne.s32.totalorder %s95, %s97
      %p101 = scmp.eq.s32.totalorder %s14, 0
      %p102 = por %p100, %p101
      %p103 = scmp.ne.s32.totalorder %s95, %s97
      %p104 = scmp.eq.s32.totalorder %s19, 3
      %p105 = por %p103, %p104
      %p106 = scmp.ne.s32.totalorder %s97, %s98
      %p107 = scmp.eq.s32.totalorder %s19, 0
      %p108 = por %p106, %p107
      %p109 = scmp.ne.s32.totalorder %s97, %s98
      %p110 = scmp.eq.s32.totalorder %s20, 3
      %p111 = por %p109, %p110
      %p113 = scmp.ne.s32.totalorder %s98, %s112
      %p114 = scmp.eq.s32.totalorder %s20, 0
      %p115 = por %p113, %p114
      %s116 = ssub.s32 %s14, %s21
      %p117 = scmp.eq.s32.totalorder %s116, 0
      %s119 = sadd.s32 %s118, 1
      %s120 = scalar_select %p117, %s118, %s119
      %p123 = pneg %p117
      %p124 = scmp.eq.s32.totalorder %s14, 3
      %p125 = por %p123, %p124
      %p126 = scmp.ne.s32.totalorder %s118, %s121
      %p127 = scmp.eq.s32.totalorder %s14, 0
      %p128 = por %p126, %p127
      %p129 = scmp.ne.s32.totalorder %s118, %s121
      %p130 = scmp.eq.s32.totalorder %s19, 3
      %p131 = por %p129, %p130
      %p132 = scmp.ne.s32.totalorder %s121, %s122
      %p133 = scmp.eq.s32.totalorder %s19, 0
      %p134 = por %p132, %p133
      %p135 = scmp.ne.s32.totalorder %s121, %s122
      %p136 = scmp.eq.s32.totalorder %s20, 3
      %p137 = por %p135, %p136
      %p139 = scmp.ne.s32.totalorder %s122, %s138
      %p140 = scmp.eq.s32.totalorder %s20, 0
      %p141 = por %p139, %p140
      %p142 = scmp.le.s32.totalorder 1, %s14
      %p143 = scmp.lt.s32.totalorder %s14, 5
      %p144 = pnand %p142, %p143
      %p145 = pneg %p144
      // Predicated region
      $region9: #{tpu_custom_call.1} parent=5 // pred_check
        _
      $region10: #{tpu_custom_call.1} parent=5 // pred_check_branch
        %147 = sbr.rel (%p144) target = $region12
      $region11: #{tpu_custom_call.1} parent=5 // pred_region
        %s148 = ssub.s32 %s14, 1
        // Predicated region
        $region13: #{tpu_custom_call.1} parent=11 // pred_check
          %p149 = pneg %p61
        $region14: #{tpu_custom_call.1} parent=11 // pred_check_branch
          %151 = sbr.rel (%p149) target = $region16
        $region15: #{tpu_custom_call.1} parent=11 // pred_region
          %s153 = ssub.s32 4096, 4096
          %154 = vsyncadd [#allocation3], %s153
          %s155 = sshll.u32 [#allocation2], 4
          %s156 = int_to_ptr.vmem [resolvable:$true] %s155
          %161 = dma.hbm_to_vmem [thread:$0]  %s1, 4096, %s156, [#allocation3], 128, 128, 8
        $region16: #{tpu_custom_call.1} parent=11 // pred_fallthru
          _
        // Predicated region
        $region17: #{tpu_custom_call.1} parent=11 // pred_check
          %p162 = pneg %p108
        $region18: #{tpu_custom_call.1} parent=11 // pred_check_branch
          %164 = sbr.rel (%p162) target = $region20
        $region19: #{tpu_custom_call.1} parent=11 // pred_region
          _
        $region20: #{tpu_custom_call.1} parent=11 // pred_fallthru
          _
      $region12: #{tpu_custom_call.1} parent=5 // pred_fallthru
        _
      %p165 = scmp.lt.s32.totalorder %s14, 4
      // Predicated region
      $region21: #{tpu_custom_call.1} parent=5 // pred_check
        %p166 = pneg %p165
      $region22: #{tpu_custom_call.1} parent=5 // pred_check_branch
        %168 = sbr.rel (%p166) target = $region24
      $region23: #{tpu_custom_call.1} parent=5 // pred_region
        // Predicated region
        $region25: #{tpu_custom_call.1} parent=23 // pred_check
          %p169 = pneg %p34
        $region26: #{tpu_custom_call.1} parent=23 // pred_check_branch
          %171 = sbr.rel (%p169) target = $region28
        $region27: #{tpu_custom_call.1} parent=23 // pred_region
          %s172 = smul.u32 8, %s14
          %p173 = scmp.lt.s32.totalorder %s172, 31
          %s174 = scalar_select %p173, %s172, 31
          %s175 = smul.addr %s174, 2
          %s176 = smul.addr %s175, 4
          %s177 = scalar_lea.vmem %s0, %s176
          %s178 = smul.u32 8, %s14
        $region28: #{tpu_custom_call.1} parent=23 // pred_fallthru
          _
        // Predicated region
        $region29: #{tpu_custom_call.1} parent=23 // pred_check
          %p179 = pneg %p81
        $region30: #{tpu_custom_call.1} parent=23 // pred_check_branch
          %181 = sbr.rel (%p179) target = $region32
        $region31: #{tpu_custom_call.1} parent=23 // pred_region
          %s182 = smul.u32 8, %s14
          %p183 = scmp.lt.s32.totalorder %s182, 31
          %s184 = scalar_select %p183, %s182, 31
          %s185 = smul.addr %s184, 8
          %s186 = scalar_lea.vmem %s2, %s185
          %s187 = smul.u32 8, %s14
        $region32: #{tpu_custom_call.1} parent=23 // pred_fallthru
          _
      $region24: #{tpu_custom_call.1} parent=5 // pred_fallthru
        _
      %p188 = scmp.le.s32.totalorder 1, %s14
      %p189 = scmp.lt.s32.totalorder %s14, 5
      %p190 = pnand %p188, %p189
      %p191 = pneg %p190
      // Predicated region
      $region33: #{tpu_custom_call.1} parent=5 // pred_check
        _
      $region34: #{tpu_custom_call.1} parent=5 // pred_check_branch
        %193 = sbr.rel (%p190) target = $region36
      $region35: #{tpu_custom_call.1} parent=5 // pred_region
        %s194 = ssub.s32 %s14, 1
        // Predicated region
        $region37: #{tpu_custom_call.1} parent=35 // pred_check
          %p195 = pneg %p61
        $region38: #{tpu_custom_call.1} parent=35 // pred_check_branch
          %197 = sbr.rel (%p195) target = $region40
        $region39: #{tpu_custom_call.1} parent=35 // pred_region
          %198 = dma.done [#allocation3], 4096
        $region40: #{tpu_custom_call.1} parent=35 // pred_fallthru
          _
        %s199 = smul.u32 8, %s19
        %p200 = scmp.lt.s32.totalorder %s199, 31
        %s201 = scalar_select %p200, %s199, 31
        %s202 = smul.addr %s201, 2
        %s203 = smul.addr %s202, 4
        %s204 = scalar_lea.vmem %s0, %s203
        %p205 = pneg %p40
        %p206 = pneg %p37
        %p207 = pneg %p61
        %p208 = pneg %p58
        %s209 = smul.u32 8, %s19
        %p210 = scmp.lt.s32.totalorder %s209, 31
        %s211 = scalar_select %p210, %s209, 31
        %s212 = smul.addr %s211, 8
        %s213 = scalar_lea.vmem %s2, %s212
        %p214 = pneg %p87
        %p215 = pneg %p84
        %p216 = pneg %p108
        %p217 = pneg %p105
        %p218 = pneg %p134
        %p219 = pneg %p131
        %s220 = sand.u32 %s121, 1
        %s221 = scalar_lea.sflag [#allocation4], %s220
        %s222 = sand.u32 %s121, 1
        %s223 = smul.addr %s222, 128
        %s224 = scalar_lea.vmem [#allocation5], %s223
        %s225 = smul.u32 8, %s19
        %p226 = scmp.lt.s32.totalorder %s225, 31
        %s227 = scalar_select %p226, %s225, 31
        %s228 = smul.addr %s227, 2
        %s229 = smul.addr %s228, 4
        %s230 = scalar_lea.vmem %s0, %s229
        %s231 = smul.u32 8, %s19
        %s232 = smul.u32 8, %s19
        %p233 = scmp.lt.s32.totalorder %s232, 31
        %s234 = scalar_select %p233, %s232, 31
        %s235 = smul.addr %s234, 8
        %s236 = scalar_lea.vmem %s2, %s235
        %s237 = smul.u32 8, %s19
        %s238 = smul.u32 8, %s19
        %v239 = vld [vmem:[%s230] sm:$0xff]
        %v240 = vld [vmem:[%s230 + $0x8] sm:$0xff]
        %v241 = vld [vmem:[%s230 + $0x10] sm:$0xff]
        %v242 = vld [vmem:[%s230 + $0x18] sm:$0xff]
        %v243 = vld [vmem:[%s230 + $0x20] sm:$0xff]
        %v244 = vld [vmem:[%s230 + $0x28] sm:$0xff]
        %v245 = vld [vmem:[%s230 + $0x30] sm:$0xff]
        %v246 = vld [vmem:[%s230 + $0x38] sm:$0xff]
        %v247 = vld [vmem:[#allocation2] sm:$0xff]
        %v248 = vld [vmem:[#allocation2 + $0x8] sm:$0xff]
        %v249 = vld [vmem:[#allocation2 + $0x10] sm:$0xff]
        %v250 = vld [vmem:[#allocation2 + $0x18] sm:$0xff]
        %v251 = vld [vmem:[#allocation2 + $0x20] sm:$0xff]
        %v252 = vld [vmem:[#allocation2 + $0x28] sm:$0xff]
        %v253 = vld [vmem:[#allocation2 + $0x30] sm:$0xff]
        %v254 = vld [vmem:[#allocation2 + $0x38] sm:$0xff]
        %v255 = vld [vmem:[#allocation2 + $0x40] sm:$0xff]
        %v256 = vld [vmem:[#allocation2 + $0x48] sm:$0xff]
        %v257 = vld [vmem:[#allocation2 + $0x50] sm:$0xff]
        %v258 = vld [vmem:[#allocation2 + $0x58] sm:$0xff]
        %v259 = vld [vmem:[#allocation2 + $0x60] sm:$0xff]
        %v260 = vld [vmem:[#allocation2 + $0x68] sm:$0xff]
        %v261 = vld [vmem:[#allocation2 + $0x70] sm:$0xff]
        %v262 = vld [vmem:[#allocation2 + $0x78] sm:$0xff]
        %v263 = vld [vmem:[#allocation2 + $0x80] sm:$0xff]
        %v264 = vld [vmem:[#allocation2 + $0x88] sm:$0xff]
        %v265 = vld [vmem:[#allocation2 + $0x90] sm:$0xff]
        %v266 = vld [vmem:[#allocation2 + $0x98] sm:$0xff]
        %v267 = vld [vmem:[#allocation2 + $0xa0] sm:$0xff]
        %v268 = vld [vmem:[#allocation2 + $0xa8] sm:$0xff]
        %v269 = vld [vmem:[#allocation2 + $0xb0] sm:$0xff]
        %v270 = vld [vmem:[#allocation2 + $0xb8] sm:$0xff]
        %v271 = vld [vmem:[#allocation2 + $0xc0] sm:$0xff]
        %v272 = vld [vmem:[#allocation2 + $0xc8] sm:$0xff]
        %v273 = vld [vmem:[#allocation2 + $0xd0] sm:$0xff]
        %v274 = vld [vmem:[#allocation2 + $0xd8] sm:$0xff]
        %v275 = vld [vmem:[#allocation2 + $0xe0] sm:$0xff]
        %v276 = vld [vmem:[#allocation2 + $0xe8] sm:$0xff]
        %v277 = vld [vmem:[#allocation2 + $0xf0] sm:$0xff]
        %v278 = vld [vmem:[#allocation2 + $0xf8] sm:$0xff]
        %v279 = vld [vmem:[%s236] sm:$0xff]
        %v280 = vld [vmem:[%s236 + $0x8] sm:$0xff]
        %v281 = vld [vmem:[%s236 + $0x10] sm:$0xff]
        %v282 = vld [vmem:[%s236 + $0x18] sm:$0xff]
        %v283 = vld [vmem:[%s236 + $0x20] sm:$0xff]
        %v284 = vld [vmem:[%s236 + $0x28] sm:$0xff]
        %v285 = vld [vmem:[%s236 + $0x30] sm:$0xff]
        %v286 = vld [vmem:[%s236 + $0x38] sm:$0xff]
        %v287 = vld [vmem:[%s3] sm:$0xff]
        %v288 = vld [vmem:[%s3 + $0x8] sm:$0xff]
        %v289 = vld [vmem:[%s3 + $0x10] sm:$0xff]
        %v290 = vld [vmem:[%s3 + $0x18] sm:$0xff]
        %vm291 = vcmask 130048
        %v293 = vsel %vm291, %v279, 0
        %v296 = vsel %vm291, %v280, 0
        %v299 = vsel %vm291, %v281, 0
        %v302 = vsel %vm291, %v282, 0
        %v305 = vsel %vm291, %v283, 0
        %v308 = vsel %vm291, %v284, 0
        %v311 = vsel %vm291, %v285, 0
        %v314 = vsel %vm291, %v286, 0
        %316 = vmatprep.subr.mxu0 0.0
        %317 = vmatpush1.msra.mxu0 0.0
        %318 = vmatprep.subr.mxu0 0.0
        %319 = vmatpush1.msra.mxu0 0.0
        %320 = vmatprep.subr.mxu0 0.0
        %321 = vmatpush1.msra.mxu0 0.0
        %322 = vmatprep.subr.mxu0 0.0
        %323 = vmatpush1.msra.mxu0 0.0
        %324 = vmatprep.subr.mxu0 0.0
        %325 = vmatpush1.msra.mxu0 0.0
        %326 = vmatprep.subr.mxu0 0.0
        %327 = vmatpush1.msra.mxu0 0.0
        %328 = vmatprep.subr.mxu0 0.0
        %329 = vmatpush1.msra.mxu0 0.0
        %330 = vmatprep.subr.mxu0 0.0
        %331 = vmatpush1.msra.mxu0 0.0
        %332 = vmatprep.subr.mxu0 0.0
        %333 = vmatpush1.msra.mxu0 0.0
        %334 = vmatprep.subr.mxu0 0.0
        %335 = vmatpush1.msra.mxu0 0.0
        %336 = vmatprep.subr.mxu0 0.0
        %337 = vmatpush1.msra.mxu0 0.0
        %338 = vmatprep.subr.mxu0 0.0
        %339 = vmatpush1.msra.mxu0 0.0
        %340 = vmatprep.subr.mxu0 0.0
        %341 = vmatpush1.msra.mxu0 0.0
        %342 = vmatprep.subr.mxu0 0.0
        %343 = vmatpush1.msra.mxu0 0.0
        %344 = vmatprep.subr.mxu0 %v290
        %345 = vmatpush1.msra.mxu0 %v289
        %346 = vmatprep.subr.mxu0 %v288
        %347 = vmatpush1.msra.mxu0 %v287
        %348 = vmatprep.subr.mxu0 0.0
        %349 = vmatpush2.msra.mxu0 0.0
        %350 = vmatprep.subr.mxu0 0.0
        %351 = vmatpush2.msra.mxu0 0.0
        %352 = vmatprep.subr.mxu0 0.0
        %353 = vmatpush2.msra.mxu0 0.0
        %354 = vmatprep.subr.mxu0 0.0
        %355 = vmatpush2.msra.mxu0 0.0
        %356 = vmatprep.subr.mxu0 0.0
        %357 = vmatpush2.msra.mxu0 0.0
        %358 = vmatprep.subr.mxu0 0.0
        %359 = vmatpush2.msra.mxu0 0.0
        %360 = vmatprep.subr.mxu0 0.0
        %361 = vmatpush2.msra.mxu0 0.0
        %362 = vmatprep.subr.mxu0 0.0
        %363 = vmatpush2.msra.mxu0 0.0
        %364 = vmatprep.subr.mxu0 0.0
        %365 = vmatpush2.msra.mxu0 0.0
        %366 = vmatprep.subr.mxu0 0.0
        %367 = vmatpush2.msra.mxu0 0.0
        %368 = vmatprep.subr.mxu0 0.0
        %369 = vmatpush2.msra.mxu0 0.0
        %370 = vmatprep.subr.mxu0 0.0
        %371 = vmatpush2.msra.mxu0 0.0
        %372 = vmatprep.subr.mxu0 0.0
        %373 = vmatpush2.msra.mxu0 0.0
        %374 = vmatprep.subr.mxu0 0.0
        %375 = vmatpush2.msra.mxu0 0.0
        %376 = vmatprep.subr.mxu0 0.0
        %377 = vmatpush2.msra.mxu0 0.0
        %378 = vmatprep.subr.mxu0 0.0
        %379 = vmatpush2.msra.mxu0 0.0
        %380 = vmatprep.mubr.f32.mxu0 0.0
        %381 = vmatmul.mubr.f32.gmra.mxu0 %v293
        %v382 = vpop.f32.mrf.mxu0
        %v383 = vadd.f32 0.0, %v382
        %v384 = vpop.f32.mrf.mxu0
        %v385 = vadd.f32 0.0, %v384
        %386 = vmatprep.mubr.f32.mxu0 0.0
        %387 = vmatmul.mubr.f32.gmra.mxu0 %v296
        %v388 = vpop.f32.mrf.mxu0
        %v389 = vadd.f32 0.0, %v388
        %v390 = vpop.f32.mrf.mxu0
        %v391 = vadd.f32 0.0, %v390
        %392 = vmatprep.mubr.f32.mxu0 0.0
        %393 = vmatmul.mubr.f32.gmra.mxu0 %v299
        %v394 = vpop.f32.mrf.mxu0
        %v395 = vadd.f32 0.0, %v394
        %v396 = vpop.f32.mrf.mxu0
        %v397 = vadd.f32 0.0, %v396
        %398 = vmatprep.mubr.f32.mxu0 0.0
        %399 = vmatmul.mubr.f32.gmra.mxu0 %v302
        %v400 = vpop.f32.mrf.mxu0
        %v401 = vadd.f32 0.0, %v400
        %v402 = vpop.f32.mrf.mxu0
        %v403 = vadd.f32 0.0, %v402
        %404 = vmatprep.mubr.f32.mxu0 0.0
        %405 = vmatmul.mubr.f32.gmra.mxu0 %v305
        %v406 = vpop.f32.mrf.mxu0
        %v407 = vadd.f32 0.0, %v406
        %v408 = vpop.f32.mrf.mxu0
        %v409 = vadd.f32 0.0, %v408
        %410 = vmatprep.mubr.f32.mxu0 0.0
        %411 = vmatmul.mubr.f32.gmra.mxu0 %v308
        %v412 = vpop.f32.mrf.mxu0
        %v413 = vadd.f32 0.0, %v412
        %v414 = vpop.f32.mrf.mxu0
        %v415 = vadd.f32 0.0, %v414
        %416 = vmatprep.mubr.f32.mxu0 0.0
        %417 = vmatmul.mubr.f32.gmra.mxu0 %v311
        %v418 = vpop.f32.mrf.mxu0
        %v419 = vadd.f32 0.0, %v418
        %v420 = vpop.f32.mrf.mxu0
        %v421 = vadd.f32 0.0, %v420
        %422 = vmatprep.mubr.f32.mxu0 0.0
        %423 = vmatmul.mubr.f32.gmra.mxu0 %v314
        %v424 = vpop.f32.mrf.mxu0
        %v425 = vadd.f32 0.0, %v424
        %v426 = vpop.f32.mrf.mxu0
        %v427 = vadd.f32 0.0, %v426
        %428 = vdwg.mxu0
        %v437 = vunpack.c.l.b16 %v239
        %v438 = vunpack.c.h.b16 %v239
        %v439 = vunpack.c.l.b16 %v240
        %v440 = vunpack.c.h.b16 %v240
        %v441 = vunpack.c.l.b16 %v241
        %v442 = vunpack.c.h.b16 %v241
        %v443 = vunpack.c.l.b16 %v242
        %v444 = vunpack.c.h.b16 %v242
        %v445 = vunpack.c.l.b16 %v243
        %v446 = vunpack.c.h.b16 %v243
        %v447 = vunpack.c.l.b16 %v244
        %v448 = vunpack.c.h.b16 %v244
        %v449 = vunpack.c.l.b16 %v245
        %v450 = vunpack.c.h.b16 %v245
        %v451 = vunpack.c.l.b16 %v246
        %v452 = vunpack.c.h.b16 %v246
        %v453 = vpack.c.b16 %v439, %v437
        %v454 = vpack.c.b16 %v440, %v438
        %v455 = vpack.c.b16 %v443, %v441
        %v456 = vpack.c.b16 %v444, %v442
        %v457 = vpack.c.b16 %v447, %v445
        %v458 = vpack.c.b16 %v448, %v446
        %v459 = vpack.c.b16 %v451, %v449
        %v460 = vpack.c.b16 %v452, %v450
        %v501 = vunpack.c.l.b16 %v247
        %v502 = vunpack.c.h.b16 %v247
        %v503 = vunpack.c.l.b16 %v248
        %v504 = vunpack.c.h.b16 %v248
        %v505 = vunpack.c.l.b16 %v249
        %v506 = vunpack.c.h.b16 %v249
        %v507 = vunpack.c.l.b16 %v250
        %v508 = vunpack.c.h.b16 %v250
        %v509 = vunpack.c.l.b16 %v251
        %v510 = vunpack.c.h.b16 %v251
        %v511 = vunpack.c.l.b16 %v252
        %v512 = vunpack.c.h.b16 %v252
        %v513 = vunpack.c.l.b16 %v253
        %v514 = vunpack.c.h.b16 %v253
        %v515 = vunpack.c.l.b16 %v254
        %v516 = vunpack.c.h.b16 %v254
        %v517 = vunpack.c.l.b16 %v255
        %v518 = vunpack.c.h.b16 %v255
        %v519 = vunpack.c.l.b16 %v256
        %v520 = vunpack.c.h.b16 %v256
        %v521 = vunpack.c.l.b16 %v257
        %v522 = vunpack.c.h.b16 %v257
        %v523 = vunpack.c.l.b16 %v258
        %v524 = vunpack.c.h.b16 %v258
        %v525 = vunpack.c.l.b16 %v259
        %v526 = vunpack.c.h.b16 %v259
        %v527 = vunpack.c.l.b16 %v260
        %v528 = vunpack.c.h.b16 %v260
        %v529 = vunpack.c.l.b16 %v261
        %v530 = vunpack.c.h.b16 %v261
        %v531 = vunpack.c.l.b16 %v262
        %v532 = vunpack.c.h.b16 %v262
        %v533 = vunpack.c.l.b16 %v263
        %v534 = vunpack.c.h.b16 %v263
        %v535 = vunpack.c.l.b16 %v264
        %v536 = vunpack.c.h.b16 %v264
        %v537 = vunpack.c.l.b16 %v265
        %v538 = vunpack.c.h.b16 %v265
        %v539 = vunpack.c.l.b16 %v266
        %v540 = vunpack.c.h.b16 %v266
        %v541 = vunpack.c.l.b16 %v267
        %v542 = vunpack.c.h.b16 %v267
        %v543 = vunpack.c.l.b16 %v268
        %v544 = vunpack.c.h.b16 %v268
        %v545 = vunpack.c.l.b16 %v269
        %v546 = vunpack.c.h.b16 %v269
        %v547 = vunpack.c.l.b16 %v270
        %v548 = vunpack.c.h.b16 %v270
        %v549 = vunpack.c.l.b16 %v271
        %v550 = vunpack.c.h.b16 %v271
        %v551 = vunpack.c.l.b16 %v272
        %v552 = vunpack.c.h.b16 %v272
        %v553 = vunpack.c.l.b16 %v273
        %v554 = vunpack.c.h.b16 %v273
        %v555 = vunpack.c.l.b16 %v274
        %v556 = vunpack.c.h.b16 %v274
        %v557 = vunpack.c.l.b16 %v275
        %v558 = vunpack.c.h.b16 %v275
        %v559 = vunpack.c.l.b16 %v276
        %v560 = vunpack.c.h.b16 %v276
        %v561 = vunpack.c.l.b16 %v277
        %v562 = vunpack.c.h.b16 %v277
        %v563 = vunpack.c.l.b16 %v278
        %v564 = vunpack.c.h.b16 %v278
        %v565 = vpack.c.b16 %v503, %v501
        %v566 = vpack.c.b16 %v504, %v502
        %v567 = vpack.c.b16 %v507, %v505
        %v568 = vpack.c.b16 %v508, %v506
        %v569 = vpack.c.b16 %v511, %v509
        %v570 = vpack.c.b16 %v512, %v510
        %v571 = vpack.c.b16 %v515, %v513
        %v572 = vpack.c.b16 %v516, %v514
        %v573 = vpack.c.b16 %v519, %v517
        %v574 = vpack.c.b16 %v520, %v518
        %v575 = vpack.c.b16 %v523, %v521
        %v576 = vpack.c.b16 %v524, %v522
        %v577 = vpack.c.b16 %v527, %v525
        %v578 = vpack.c.b16 %v528, %v526
        %v579 = vpack.c.b16 %v531, %v529
        %v580 = vpack.c.b16 %v532, %v530
        %v581 = vpack.c.b16 %v535, %v533
        %v582 = vpack.c.b16 %v536, %v534
        %v583 = vpack.c.b16 %v539, %v537
        %v584 = vpack.c.b16 %v540, %v538
        %v585 = vpack.c.b16 %v543, %v541
        %v586 = vpack.c.b16 %v544, %v542
        %v587 = vpack.c.b16 %v547, %v545
        %v588 = vpack.c.b16 %v548, %v546
        %v589 = vpack.c.b16 %v551, %v549
        %v590 = vpack.c.b16 %v552, %v550
        %v591 = vpack.c.b16 %v555, %v553
        %v592 = vpack.c.b16 %v556, %v554
        %v593 = vpack.c.b16 %v559, %v557
        %v594 = vpack.c.b16 %v560, %v558
        %v595 = vpack.c.b16 %v563, %v561
        %v596 = vpack.c.b16 %v564, %v562
        %629 = vmatprep.subr.bf16.mxu0 %v580
        %630 = vmatpush1.bf16.msra.mxu0 %v579
        %631 = vmatprep.subr.bf16.mxu0 %v578
        %632 = vmatpush1.bf16.msra.mxu0 %v577
        %633 = vmatprep.subr.bf16.mxu0 %v576
        %634 = vmatpush1.bf16.msra.mxu0 %v575
        %635 = vmatprep.subr.bf16.mxu0 %v574
        %636 = vmatpush1.bf16.msra.mxu0 %v573
        %637 = vmatprep.subr.bf16.mxu0 %v572
        %638 = vmatpush1.bf16.msra.mxu0 %v571
        %639 = vmatprep.subr.bf16.mxu0 %v570
        %640 = vmatpush1.bf16.msra.mxu0 %v569
        %641 = vmatprep.subr.bf16.mxu0 %v568
        %642 = vmatpush1.bf16.msra.mxu0 %v567
        %643 = vmatprep.subr.bf16.mxu0 %v566
        %644 = vmatpush1.bf16.msra.mxu0 %v565
        %645 = vmatprep.subr.bf16.mxu0 %v596
        %646 = vmatpush2.bf16.msra.mxu0 %v595
        %647 = vmatprep.subr.bf16.mxu0 %v594
        %648 = vmatpush2.bf16.msra.mxu0 %v593
        %649 = vmatprep.subr.bf16.mxu0 %v592
        %650 = vmatpush2.bf16.msra.mxu0 %v591
        %651 = vmatprep.subr.bf16.mxu0 %v590
        %652 = vmatpush2.bf16.msra.mxu0 %v589
        %653 = vmatprep.subr.bf16.mxu0 %v588
        %654 = vmatpush2.bf16.msra.mxu0 %v587
        %655 = vmatprep.subr.bf16.mxu0 %v586
        %656 = vmatpush2.bf16.msra.mxu0 %v585
        %657 = vmatprep.subr.bf16.mxu0 %v584
        %658 = vmatpush2.bf16.msra.mxu0 %v583
        %659 = vmatprep.subr.bf16.mxu0 %v582
        %660 = vmatpush2.bf16.msra.mxu0 %v581
        %661 = vmatprep.mubr.bf16.mxu0 %v454
        %662 = vmatmul.mubr.bf16.gmra.mxu0 %v453
        %v663 = vpop.f32.mrf.mxu0
        %v664 = vadd.f32 %v383, %v663
        %v665 = vpop.f32.mrf.mxu0
        %v666 = vadd.f32 %v385, %v665
        %v667 = vpop.f32.mrf.mxu0
        %v668 = vadd.f32 %v389, %v667
        %v669 = vpop.f32.mrf.mxu0
        %v670 = vadd.f32 %v391, %v669
        %671 = vmatprep.mubr.bf16.mxu0 %v456
        %672 = vmatmul.mubr.bf16.gmra.mxu0 %v455
        %v673 = vpop.f32.mrf.mxu0
        %v674 = vadd.f32 %v395, %v673
        %v675 = vpop.f32.mrf.mxu0
        %v676 = vadd.f32 %v397, %v675
        %v677 = vpop.f32.mrf.mxu0
        %v678 = vadd.f32 %v401, %v677
        %v679 = vpop.f32.mrf.mxu0
        %v680 = vadd.f32 %v403, %v679
        %681 = vmatprep.mubr.bf16.mxu0 %v458
        %682 = vmatmul.mubr.bf16.gmra.mxu0 %v457
        %v683 = vpop.f32.mrf.mxu0
        %v684 = vadd.f32 %v407, %v683
        %v685 = vpop.f32.mrf.mxu0
        %v686 = vadd.f32 %v409, %v685
        %v687 = vpop.f32.mrf.mxu0
        %v688 = vadd.f32 %v413, %v687
        %v689 = vpop.f32.mrf.mxu0
        %v690 = vadd.f32 %v415, %v689
        %691 = vmatprep.mubr.bf16.mxu0 %v460
        %692 = vmatmul.mubr.bf16.gmra.mxu0 %v459
        %v693 = vpop.f32.mrf.mxu0
        %v694 = vadd.f32 %v419, %v693
        %v695 = vpop.f32.mrf.mxu0
        %v696 = vadd.f32 %v421, %v695
        %v697 = vpop.f32.mrf.mxu0
        %v698 = vadd.f32 %v425, %v697
        %v699 = vpop.f32.mrf.mxu0
        %v700 = vadd.f32 %v427, %v699
        %701 = vdwg.mxu0
        %702 = vst [vmem:[%s224] sm:$0xff] %v664
        %703 = vst [vmem:[%s224 + $0x8] sm:$0xff] %v666
        %704 = vst [vmem:[%s224 + $0x10] sm:$0xff] %v668
        %705 = vst [vmem:[%s224 + $0x18] sm:$0xff] %v670
        %706 = vst [vmem:[%s224 + $0x20] sm:$0xff] %v674
        %707 = vst [vmem:[%s224 + $0x28] sm:$0xff] %v676
        %708 = vst [vmem:[%s224 + $0x30] sm:$0xff] %v678
        %709 = vst [vmem:[%s224 + $0x38] sm:$0xff] %v680
        %710 = vst [vmem:[%s224 + $0x40] sm:$0xff] %v684
        %711 = vst [vmem:[%s224 + $0x48] sm:$0xff] %v686
        %712 = vst [vmem:[%s224 + $0x50] sm:$0xff] %v688
        %713 = vst [vmem:[%s224 + $0x58] sm:$0xff] %v690
        %714 = vst [vmem:[%s224 + $0x60] sm:$0xff] %v694
        %715 = vst [vmem:[%s224 + $0x68] sm:$0xff] %v696
        %716 = vst [vmem:[%s224 + $0x70] sm:$0xff] %v698
        %717 = vst [vmem:[%s224 + $0x78] sm:$0xff] %v700
        %s718 = sand.u32 %s121, 1
        %s719 = scalar_lea.sflag [#allocation4], %s718
        %s720 = sand.u32 %s121, 1
        %s721 = smul.addr %s720, 128
        %s722 = scalar_lea.vmem [#allocation5], %s721
        // Predicated region
        $region41: #{tpu_custom_call.1} parent=35 // pred_check
          %p723 = pneg %p131
        $region42: #{tpu_custom_call.1} parent=35 // pred_check_branch
          %725 = sbr.rel (%p723) target = $region44
        $region43: #{tpu_custom_call.1} parent=35 // pred_region
          %s726 = smul.u32 8, %s19
          %s728 = ssub.s32 2048, 2048
          %729 = vsyncadd %s719, %s728
          %s730 = smul.addr %s726, 2
          %s731 = smul.addr %s730, 128
          %s732 = scalar_lea.hbm %s4, %s731
          %s733 = sshll.u32 %s722, 4
          %s734 = int_to_ptr.vmem [resolvable:$true] %s733
          %739 = dma.vmem_to_hbm [thread:$0]  %s734, 2048, %s732, %s719, 256, 256, 16
        $region44: #{tpu_custom_call.1} parent=35 // pred_fallthru
          _
      $region36: #{tpu_custom_call.1} parent=5 // pred_fallthru
        _
      %p740 = scmp.le.s32.totalorder 2, %s14
      // Predicated region
      $region45: #{tpu_custom_call.1} parent=5 // pred_check
        %p741 = pneg %p740
      $region46: #{tpu_custom_call.1} parent=5 // pred_check_branch
        %743 = sbr.rel (%p741) target = $region48
      $region47: #{tpu_custom_call.1} parent=5 // pred_region
        %s744 = ssub.s32 %s14, 2
        // Predicated region
        $region49: #{tpu_custom_call.1} parent=47 // pred_check
          %p745 = pneg %p137
        $region50: #{tpu_custom_call.1} parent=47 // pred_check_branch
          %747 = sbr.rel (%p745) target = $region52
        $region51: #{tpu_custom_call.1} parent=47 // pred_region
          %s748 = sand.u32 %s122, 1
          %s749 = scalar_lea.sflag [#allocation4], %s748
          %s750 = sand.u32 %s122, 1
          %s751 = smul.addr %s750, 128
          %s752 = scalar_lea.vmem [#allocation5], %s751
          %753 = dma.done %s749, 2048
        $region52: #{tpu_custom_call.1} parent=47 // pred_fallthru
          _
      $region48: #{tpu_custom_call.1} parent=5 // pred_fallthru
        _
    $region6: #{tpu_custom_call.1} parent=1 // loop_footer
      %s18 = sadd.s32 1, %s14
    $region7: #{tpu_custom_call.1} parent=1 // loop_footer_branch
      %13 = sbr.rel target = $region3
    $region8: #{tpu_custom_call.1} parent=1 // loop_exit
      _
    %754 = vsyncpa [#allocation3], 1
    %s755 = scalar_lea.sflag [#allocation3], 1
    %756 = vsyncpa %s755, 1
    %757 = vsyncpa [#allocation4], 1
    %s758 = scalar_lea.sflag [#allocation4], 1
    %759 = vsyncpa %s758, 1

</llo_original>
